<compile_context>
chip_gen: v5e
topology: v5e:2x2
jax: 0.10.0
libtpu: 0.0.40
codegen_flags: <defaults>
</compile_context>

<pallas_src>
import functools
import math

import jax
import jax.numpy as jnp
from jax import lax
from jax.experimental import pallas as pl
from jax.experimental.pallas import tpu as pltpu


_VMEM_TARGET = 24 * 1024 * 1024   # conservative working-set target (v7x: 64 MiB phys)


def _img_perceiver_kernel(x_ref, q_ref, wkv_ref, wo_ref, bo_ref, o_ref, kv_acc,
                          *, tb, C, L, dl, tk, weight_resident):
    """Grid = (batch tiles, D tiles).  Accumulates the fused K|V projection over
    the D axis into one (R, 2*dl) f32 scratch; on the last D tile runs
    cross-attention + mean-pool + head + softplus for the whole batch tile."""
    di = pl.program_id(1)

    @pl.when(di == 0)
    def _init():
        kv_acc[...] = jnp.zeros_like(kv_acc)

    x = x_ref[...]                                    # (R, tk) compute dtype
    if weight_resident:
        # Full (Dp, 2*dl) weight is VMEM-resident (constant block index ->
        # DMA'd once for the whole grid); slice the current D tile.
        start = pl.multiple_of(di * tk, 128)
        w = wkv_ref[pl.ds(start, tk), :]
    else:
        w = wkv_ref[...]                              # (tk, 2*dl)
    # One N = 2*dl matmul per step (fills the 256-wide MXU on v6e/v7x).
    kv_acc[...] += jnp.dot(x, w, preferred_element_type=jnp.float32)

    @pl.when(di == pl.num_programs(1) - 1)
    def _finish():
        kv = kv_acc[...]                              # (R, 2*dl) f32
        k = kv[:, :dl]                                # 128-lane-aligned slices
        v = kv[:, dl:]
        q = q_ref[...]                                # (L, dl) f32, pre-scaled

        # scores s[b*C+c, l] = q[l] . k[b, c]
        s = lax.dot_general(k, q, (((1,), (1,)), ((), ())),
                            preferred_element_type=jnp.float32)     # (R, L)

        # Per-(batch, latent) softmax over the C channel rows (segment max so
        # one batch's large scores can't underflow another batch in the tile).
        s3 = s.reshape(tb, C, L)
        m = jnp.max(s3, axis=1, keepdims=True)                      # (tb, 1, L)
        e = jnp.exp(s3 - m)                                         # (tb, C, L)
        denom = jnp.sum(e, axis=1, keepdims=True)                   # (tb, 1, L)
        p = e / denom                                               # exact recip

        # Mean over latents fused *before* attending (V is latent-independent):
        # pooled[b] = (1/L) * sum_c (sum_l p[b,c,l]) * v[b,c,:]
        pw = jnp.sum(p, axis=2, keepdims=True)                      # (tb, C, 1)
        v3 = v.reshape(tb, C, dl)
        pooled = jnp.sum(pw * v3, axis=1) * (1.0 / L)               # (tb, dl)

        out = jnp.dot(pooled, wo_ref[...],
                      preferred_element_type=jnp.float32) + bo_ref[...]
        # numerically stable softplus, matches F.softplus
        o_ref[...] = jnp.maximum(out, 0.0) + jnp.log(1.0 + jnp.exp(-jnp.abs(out)))


def _working_set_bytes(R, tb, tk, Dp, dl, L, out_dim, itemsize, weight_resident):
    two_dl = 2 * dl
    x_b = 2 * R * tk * itemsize                           # double-buffered x tile
    w_b = (2 * Dp * two_dl * itemsize if weight_resident
           else 2 * tk * two_dl * itemsize)               # weight buffers
    q_b = 2 * L * dl * 4
    wo_b = 2 * dl * out_dim * 4
    bo_b = 2 * out_dim * 4
    acc_b = R * two_dl * 4                                # f32 K|V accumulator
    out_b = 2 * tb * out_dim * 4
    tmp_b = 6 * R * max(L, dl) * 4                        # finalize temporaries
    return x_b + w_b + q_b + wo_b + bo_b + acc_b + out_b + tmp_b


def _legal_batch_tiles(B):
    """Batch tiles keeping the x / output blocks sublane aligned (descending)."""
    tiles = [B]
    for t in range(B - 1, 0, -1):
        if B % t == 0 and t % 8 == 0:
            tiles.append(t)
    return tiles


def _legal_d_tiles(Dp):
    """Lane-aligned D tiles dividing the (padded) D (descending)."""
    tiles = {Dp}
    for t in range(128, Dp, 128):
        if Dp % t == 0:
            tiles.add(t)
    return sorted(tiles, reverse=True)


def img_perceiver_forward(x_nchw, params, *, tb=None, tk=None,
                          compute_dtype=jnp.bfloat16):
    """x_nchw: (B, C, H, W) float32 -> (B, out_dim) float32."""
    B, C, H, W = x_nchw.shape
    D = H * W

    latents, wk, wv, wq, wo, bo = (params["latents"], params["wk"], params["wv"],
                                   params["wq"], params["wo"], params["bo"])
    L, dl = latents.shape
    out_dim = wo.shape[1]

    # Batch-independent work hoisted out of the kernel: Q projection with the
    # attention scale folded in.
    q = ((latents @ wq) * (1.0 / math.sqrt(dl))).astype(jnp.float32)

    # torch.flatten(x, start_dim=2) -> (B, C, D); fold batch into rows.
    x2d = x_nchw.reshape(B * C, D)

    # Fused K|V projection weight: one N = 2*dl matmul per D tile.
    wkv = jnp.concatenate([wk, wv], axis=1)                      # (D, 2*dl)

    # Pad D to a lane multiple so D tiles are always 128-aligned (zero rows do
    # not change x @ W).
    Dp = ((D + 127) // 128) * 128
    if Dp != D:
        x2d = jnp.pad(x2d, ((0, 0), (0, Dp - D)))
        wkv = jnp.pad(wkv, ((0, Dp - D), (0, 0)))

    itemsize = jnp.dtype(compute_dtype).itemsize
    if compute_dtype != jnp.float32:
        # Cast once in the wrapper; accumulation stays f32 in the kernel.
        x2d = x2d.astype(compute_dtype)
        wkv = wkv.astype(compute_dtype)
    wo = wo.astype(jnp.float32)
    bo = bo.astype(jnp.float32).reshape(1, out_dim)

    # ---- tiling ----------------------------------------------------------
    if tb is None:
        # Prefer >= 2 batch tiles (feeds both v7x TensorCores) as long as
        # R = tb*C keeps the MXU M dimension reasonably filled.
        tb_pref = B
        for cand in _legal_batch_tiles(B)[1:]:
            if B // cand >= 2 and cand * C >= 256:
                tb_pref = cand
                break
        tb_candidates = [t for t in _legal_batch_tiles(B) if t <= tb_pref]
    else:
        assert B % tb == 0, "batch tile must divide batch"
        assert tb == B or tb % 8 == 0, "split batch tile must be 8-aligned"
        tb_candidates = [tb]

    if tk is None:
        tk_candidates = _legal_d_tiles(Dp)
    else:
        assert Dp % tk == 0 and (tk == Dp or tk % 128 == 0), "bad D tile"
        tk_candidates = [tk]

    chosen = None
    for cur_tk in tk_candidates:            # keep tk large; shrink tb first
        for cur_tb in tb_candidates:
            R = cur_tb * C
            n_b = B // cur_tb
            n_k = Dp // cur_tk
            # Full-weight residency only pays off when both axes are tiled.
            residency_opts = (True, False) if (n_b > 1 and n_k > 1) else (False,)
            for resident in residency_opts:
                ws = _working_set_bytes(R, cur_tb, cur_tk, Dp, dl, L, out_dim,
                                        itemsize, resident)
                if ws <= _VMEM_TARGET:
                    chosen = (cur_tb, cur_tk, resident, ws)
                    break
            if chosen is not None:
                break
        if chosen is not None:
            break
    if chosen is None:
        # Smallest legal tiles; let the raised VMEM limit absorb the rest.
        cur_tb, cur_tk = tb_candidates[-1], tk_candidates[-1]
        chosen = (cur_tb, cur_tk, False,
                  _working_set_bytes(cur_tb * C, cur_tb, cur_tk, Dp, dl, L,
                                     out_dim, itemsize, False))
    tb, tk, weight_resident, ws_bytes = chosen

    R = tb * C
    n_b = B // tb
    n_k = Dp // tk

    if weight_resident:
        wkv_spec = pl.BlockSpec((Dp, 2 * dl), lambda b, k: (0, 0))
    else:
        wkv_spec = pl.BlockSpec((tk, 2 * dl), lambda b, k: (k, 0))

    kernel = functools.partial(
        _img_perceiver_kernel, tb=tb, C=C, L=L, dl=dl, tk=tk,
        weight_resident=weight_resident)

    vmem_limit = int(min(48 * 1024 * 1024, max(32 * 1024 * 1024, 2 * ws_bytes)))

    out = pl.pallas_call(
        kernel,
        out_shape=jax.ShapeDtypeStruct((B, out_dim), jnp.float32),
        grid_spec=pltpu.PrefetchScalarGridSpec(
            num_scalar_prefetch=0,
            grid=(n_b, n_k),                                        # reduction last
            in_specs=[
                pl.BlockSpec((R, tk), lambda b, k: (b, k)),         # x rows
                pl.BlockSpec((L, dl), lambda b, k: (0, 0)),         # Q (pre-scaled)
                wkv_spec,                                           # fused K|V weight
                pl.BlockSpec((dl, out_dim), lambda b, k: (0, 0)),   # Wo
                pl.BlockSpec((1, out_dim), lambda b, k: (0, 0)),    # bo
            ],
            out_specs=pl.BlockSpec((tb, out_dim), lambda b, k: (b, 0)),
            scratch_shapes=[
                pltpu.VMEM((R, 2 * dl), jnp.float32),               # fused K|V acc
            ],
        ),
        compiler_params=pltpu.CompilerParams(
            dimension_semantics=("parallel", "arbitrary"),
            vmem_limit_bytes=vmem_limit),
    )(x2d, q, wkv, wo, bo)

    # torch.squeeze on (B, 1, out_dim) -> (B, out_dim); softplus applied in-kernel.
    return out


def _reference_forward(x_nchw, params):
    B, C, H, W = x_nchw.shape
    x = x_nchw.reshape(B, C, H * W)
    lat, wk, wv, wq, wo, bo = (params["latents"], params["wk"], params["wv"],
                               params["wq"], params["wo"], params["bo"])
    dl = lat.shape[1]
    k = jnp.einsum("bcd,de->bce", x, wk)
    v = jnp.einsum("bcd,de->bce", x, wv)
    q = lat @ wq
    s = jnp.einsum("le,bce->blc", q, k) / math.sqrt(dl)
    p = jax.nn.softmax(s, axis=-1)
    z = jnp.einsum("blc,bce->ble", p, v)
    pooled = jnp.mean(z, axis=1)
    out = pooled @ wo + bo
    return jax.nn.softplus(out)


def make_params(key, *, D, num_latents=8, latent_dim=128, out_dim=128):
    ks = jax.random.split(key, 6)
    std_in = 1.0 / math.sqrt(D)
    std_l = 1.0 / math.sqrt(latent_dim)
    return {
        "latents": jax.random.normal(ks[0], (num_latents, latent_dim), jnp.float32) * 0.02,
        "wk": jax.random.normal(ks[1], (D, latent_dim), jnp.float32) * std_in,
        "wv": jax.random.normal(ks[2], (D, latent_dim), jnp.float32) * std_in,
        "wq": jax.random.normal(ks[3], (latent_dim, latent_dim), jnp.float32) * std_l,
        "wo": jax.random.normal(ks[4], (latent_dim, out_dim), jnp.float32) * std_l,
        "bo": jax.random.normal(ks[5], (1, out_dim), jnp.float32) * 0.01,
    }


if __name__ == "__main__":
    key = jax.random.PRNGKey(0)
    kx, kp = jax.random.split(key)

    B, C, H, W = 2, 4, 16, 16
    x = jax.random.normal(kx, (B, C, H, W), jnp.float32)
    params = make_params(kp, D=H * W)
    ref = _reference_forward(x, params)

    # Default path: bf16 MXU operands (v6e/v7x native), f32 accumulation.
    out_bf16 = jax.block_until_ready(img_perceiver_forward(x, params))
    assert out_bf16.shape == (B, 128), out_bf16.shape
    assert jnp.allclose(out_bf16, ref, atol=5e-2, rtol=5e-2), "bf16 mismatch vs reference"

    # f32 path with tk=128: exercises the D-axis K|V accumulation pipeline.
    out_f32 = jax.block_until_ready(
        img_perceiver_forward(x, params, tk=128, compute_dtype=jnp.float32))
    assert out_f32.shape == (B, 128), out_f32.shape
    assert jnp.allclose(out_f32, ref, atol=2e-3, rtol=2e-3), "f32 mismatch vs reference"

    # Larger batch: split batch tiles (n_b > 1) with tiled D, so the fused K|V
    # weight is held VMEM-resident (exercises the weight-resident path).
    B2 = 16
    kx2, _ = jax.random.split(kx)
    x2 = jax.random.normal(kx2, (B2, C, H, W), jnp.float32)
    ref2 = _reference_forward(x2, params)
    out2 = jax.block_until_ready(
        img_perceiver_forward(x2, params, tb=8, tk=128, compute_dtype=jnp.float32))
    assert out2.shape == (B2, 128), out2.shape
    assert jnp.allclose(out2, ref2, atol=2e-3, rtol=2e-3), "resident-path mismatch"

    print("KERNEL_OK")
</pallas_src>

<mosaic_0001>
module attributes {stable_mosaic.version = 11 : i64} {
  func.func @_img_perceiver_kernel(%arg0: i32, %arg1: i32, %arg2: memref<8x256xbf16, #tpu.memory_space<vmem>>, %arg3: memref<8x128xf32, #tpu.memory_space<vmem>>, %arg4: memref<256x256xbf16, #tpu.memory_space<vmem>>, %arg5: memref<128x128xf32, #tpu.memory_space<vmem>>, %arg6: memref<1x128xf32, #tpu.memory_space<vmem>>, %arg7: memref<2x128xf32, #tpu.memory_space<vmem>>, %arg8: memref<8x256xf32, #tpu.memory_space<vmem>>) attributes {dimension_semantics = [#tpu.dimension_semantics<parallel>, #tpu.dimension_semantics<arbitrary>], iteration_bounds = array<i64: 1, 1>, scalar_prefetch = 0 : i64, scratch_operands = 1 : i64, tpu.core_type = #tpu.core_type<tc>, window_params = [{transform_indices = @transform_0, window_bounds = array<i64: 8, 256>}, {pipeline_mode = #tpu.pipeline_mode<synchronous>, transform_indices = @transform_1, window_bounds = array<i64: 8, 128>}, {transform_indices = @transform_2, window_bounds = array<i64: 256, 256>}, {pipeline_mode = #tpu.pipeline_mode<synchronous>, transform_indices = @transform_3, window_bounds = array<i64: 128, 128>}, {pipeline_mode = #tpu.pipeline_mode<synchronous>, transform_indices = @transform_4, window_bounds = array<i64: 1, 128>}, {transform_indices = @transform_5, window_bounds = array<i64: 2, 128>}]} {
    %c0_i32 = arith.constant 0 : i32
    %0 = arith.cmpi eq, %arg1, %c0_i32 : i32
    %1 = arith.extui %0 : i1 to i32
    %c0_i32_0 = arith.constant 0 : i32
    %2 = arith.cmpi ne, %1, %c0_i32_0 : i32
    scf.if %2 {
      %cst_10 = arith.constant 0.000000e+00 : f32
      %12 = vector.broadcast %cst_10 : f32 to vector<8x256xf32>
      %c0_11 = arith.constant 0 : index
      %c0_12 = arith.constant 0 : index
      %13 = vector.load %arg8[%c0_11, %c0_12] : memref<8x256xf32, #tpu.memory_space<vmem>>, vector<8x256xf32>
      tpu.vector_store %arg8[%c0_11, %c0_12], %12 {strides = array<i32>} : memref<8x256xf32, #tpu.memory_space<vmem>>, vector<8x256xf32>,
    } else {
    }
    %c0 = arith.constant 0 : index
    %c0_1 = arith.constant 0 : index
    %3 = vector.load %arg2[%c0, %c0_1] : memref<8x256xbf16, #tpu.memory_space<vmem>>, vector<8x256xbf16>
    %c0_2 = arith.constant 0 : index
    %c0_3 = arith.constant 0 : index
    %4 = vector.load %arg4[%c0_2, %c0_3] : memref<256x256xbf16, #tpu.memory_space<vmem>>, vector<256x256xbf16>
    %c0_4 = arith.constant 0 : index
    %c0_5 = arith.constant 0 : index
    %5 = vector.load %arg8[%c0_4, %c0_5] : memref<8x256xf32, #tpu.memory_space<vmem>>, vector<8x256xf32>
    %cst = arith.constant dense<0.000000e+00> : vector<8x256xf32>
    %6 = tpu.matmul %3, %4, %cst {dimension_numbers = #tpu.dot_dimension_numbers<[1], [0], [0], [1], [0, 0, 1, 1], [], []>} : vector<8x256xbf16>, vector<256x256xbf16>, vector<8x256xf32> -> vector<8x256xf32>
    %7 = arith.addf %5, %6 : vector<8x256xf32>
    %c0_6 = arith.constant 0 : index
    %c0_7 = arith.constant 0 : index
    %8 = vector.load %arg8[%c0_6, %c0_7] : memref<8x256xf32, #tpu.memory_space<vmem>>, vector<8x256xf32>
    tpu.vector_store %arg8[%c0_6, %c0_7], %7 {strides = array<i32>} : memref<8x256xf32, #tpu.memory_space<vmem>>, vector<8x256xf32>,
    %c0_i32_8 = arith.constant 0 : i32
    %9 = arith.cmpi eq, %arg1, %c0_i32_8 : i32
    %10 = arith.extui %9 : i1 to i32
    %c0_i32_9 = arith.constant 0 : i32
    %11 = arith.cmpi ne, %10, %c0_i32_9 : i32
    scf.if %11 {
      %c0_10 = arith.constant 0 : index
      %c0_11 = arith.constant 0 : index
      %12 = vector.load %arg8[%c0_10, %c0_11] : memref<8x256xf32, #tpu.memory_space<vmem>>, vector<8x256xf32>
      %13 = vector.extract_strided_slice %12 {offsets = [0, 0], sizes = [8, 128], strides = [1, 1]} : vector<8x256xf32> to vector<8x128xf32>
      %14 = vector.extract_strided_slice %12 {offsets = [0, 128], sizes = [8, 128], strides = [1, 1]} : vector<8x256xf32> to vector<8x128xf32>
      %c0_12 = arith.constant 0 : index
      %c0_13 = arith.constant 0 : index
      %15 = vector.load %arg3[%c0_12, %c0_13] : memref<8x128xf32, #tpu.memory_space<vmem>>, vector<8x128xf32>
      %cst_14 = arith.constant dense<0.000000e+00> : vector<8x8xf32>
      %16 = tpu.matmul %13, %15, %cst_14 {dimension_numbers = #tpu.dot_dimension_numbers<[1], [1], [0], [0], [0, 0, 1, 0], [], []>} : vector<8x128xf32>, vector<8x128xf32>, vector<8x8xf32> -> vector<8x8xf32>
      %17 = vector.shape_cast %16 : vector<8x8xf32> to vector<2x4x8xf32>
      %cst_15 = arith.constant dense<0xFF800000> : vector<2x8xf32>
      %18 = vector.multi_reduction <maximumf>, %17, %cst_15 [1] : vector<2x4x8xf32> to vector<2x8xf32>
      %19 = vector.shape_cast %18 : vector<2x8xf32> to vector<2x1x8xf32>
      %20 = vector.broadcast %19 : vector<2x1x8xf32> to vector<2x4x8xf32>
      %21 = arith.subf %17, %20 : vector<2x4x8xf32>
      %22 = math.exp %21 : vector<2x4x8xf32>
      %cst_16 = arith.constant dense<0.000000e+00> : vector<2x8xf32>
      %23 = vector.multi_reduction <add>, %22, %cst_16 [1] : vector<2x4x8xf32> to vector<2x8xf32>
      %24 = vector.shape_cast %23 : vector<2x8xf32> to vector<2x1x8xf32>
      %25 = vector.broadcast %24 : vector<2x1x8xf32> to vector<2x4x8xf32>
      %26 = arith.divf %22, %25 : vector<2x4x8xf32>
      %cst_17 = arith.constant dense<0.000000e+00> : vector<2x4xf32>
      %27 = vector.multi_reduction <add>, %26, %cst_17 [2] : vector<2x4x8xf32> to vector<2x4xf32>
      %28 = vector.shape_cast %27 : vector<2x4xf32> to vector<2x4x1xf32>
      %29 = vector.shape_cast %14 : vector<8x128xf32> to vector<2x4x128xf32>
      %30 = vector.broadcast %28 : vector<2x4x1xf32> to vector<2x4x128xf32>
      %31 = arith.mulf %30, %29 : vector<2x4x128xf32>
      %cst_18 = arith.constant dense<0.000000e+00> : vector<2x128xf32>
      %32 = vector.multi_reduction <add>, %31, %cst_18 [1] : vector<2x4x128xf32> to vector<2x128xf32>
      %cst_19 = arith.constant 1.250000e-01 : f32
      %33 = vector.broadcast %cst_19 : f32 to vector<2x128xf32>
      %34 = arith.mulf %32, %33 : vector<2x128xf32>
      %c0_20 = arith.constant 0 : index
      %c0_21 = arith.constant 0 : index
      %35 = vector.load %arg5[%c0_20, %c0_21] : memref<128x128xf32, #tpu.memory_space<vmem>>, vector<128x128xf32>
      %cst_22 = arith.constant dense<0.000000e+00> : vector<2x128xf32>
      %36 = tpu.matmul %34, %35, %cst_22 {dimension_numbers = #tpu.dot_dimension_numbers<[1], [0], [0], [1], [0, 0, 1, 1], [], []>} : vector<2x128xf32>, vector<128x128xf32>, vector<2x128xf32> -> vector<2x128xf32>
      %c0_23 = arith.constant 0 : index
      %c0_24 = arith.constant 0 : index
      %37 = vector.load %arg6[%c0_23, %c0_24] : memref<1x128xf32, #tpu.memory_space<vmem>>, vector<1x128xf32>
      %38 = vector.broadcast %37 : vector<1x128xf32> to vector<2x128xf32>
      %39 = arith.addf %36, %38 : vector<2x128xf32>
      %cst_25 = arith.constant 0.000000e+00 : f32
      %40 = vector.broadcast %cst_25 : f32 to vector<2x128xf32>
      %41 = arith.maximumf %39, %40 : vector<2x128xf32>
      %42 = math.absf %39 : vector<2x128xf32>
      %cst_26 = arith.constant 0.000000e+00 : f32
      %43 = vector.broadcast %cst_26 : f32 to vector<2x128xf32>
      %44 = arith.subf %43, %42 : vector<2x128xf32>
      %45 = math.exp %44 : vector<2x128xf32>
      %cst_27 = arith.constant 1.000000e+00 : f32
      %46 = vector.broadcast %cst_27 : f32 to vector<2x128xf32>
      %47 = arith.addf %46, %45 : vector<2x128xf32>
      %48 = math.log %47 : vector<2x128xf32>
      %49 = arith.addf %41, %48 : vector<2x128xf32>
      %c0_28 = arith.constant 0 : index
      %c0_29 = arith.constant 0 : index
      %50 = vector.load %arg7[%c0_28, %c0_29] : memref<2x128xf32, #tpu.memory_space<vmem>>, vector<2x128xf32>
      tpu.vector_store %arg7[%c0_28, %c0_29], %49 {strides = array<i32>} : memref<2x128xf32, #tpu.memory_space<vmem>>, vector<2x128xf32>,
    } else {
    }
    return
  }
  func.func @transform_0(%arg0: i32, %arg1: i32) -> (i32, i32) {
    %c0_i32 = arith.constant 0 : i32
    return %arg0, %arg1 : i32, i32
  }
  func.func @transform_1(%arg0: i32, %arg1: i32) -> (i32, i32) {
    %c0_i32 = arith.constant 0 : i32
    %c0_i32_0 = arith.constant 0 : i32
    %c0_i32_1 = arith.constant 0 : i32
    return %c0_i32, %c0_i32_0 : i32, i32
  }
  func.func @transform_2(%arg0: i32, %arg1: i32) -> (i32, i32) {
    %c0_i32 = arith.constant 0 : i32
    %c0_i32_0 = arith.constant 0 : i32
    return %arg1, %c0_i32 : i32, i32
  }
  func.func @transform_3(%arg0: i32, %arg1: i32) -> (i32, i32) {
    %c0_i32 = arith.constant 0 : i32
    %c0_i32_0 = arith.constant 0 : i32
    %c0_i32_1 = arith.constant 0 : i32
    return %c0_i32, %c0_i32_0 : i32, i32
  }
  func.func @transform_4(%arg0: i32, %arg1: i32) -> (i32, i32) {
    %c0_i32 = arith.constant 0 : i32
    %c0_i32_0 = arith.constant 0 : i32
    %c0_i32_1 = arith.constant 0 : i32
    return %c0_i32, %c0_i32_0 : i32, i32
  }
  func.func @transform_5(%arg0: i32, %arg1: i32) -> (i32, i32) {
    %c0_i32 = arith.constant 0 : i32
    %c0_i32_0 = arith.constant 0 : i32
    return %arg0, %c0_i32 : i32, i32
  }
}

</mosaic_0001>

<llo_original>
// kernel: tpu_custom_call.1
$region0: #{tpu_custom_call.1}
  #allocation0 [shape = 'u32[]', space=smem, size = 0x4, offset = 0x4, fixed_abs, tag = 'smem constant byte address 0x4 - core index']
  #allocation1 [shape = 'u32[72,128]{1,0:T(1,128)}', space=vmem, size = 0x9000, scoped, tag = 'internal scratch']
  #allocation2 [shape = 'f32[8,256]{1,0:T(8,128)}', space=vmem, size = 0x2000, scoped, tag = 'scratch operand']
  %s0 = inlined_call_operand.hbm [shape: bf16[8,256], index: 0, kind: input, shape index: {}]
  %s1 = inlined_call_operand.hbm [shape: f32[8,128], index: 1, kind: input, shape index: {}]
  %s2 = inlined_call_operand.hbm [shape: bf16[256,256], index: 2, kind: input, shape index: {}]
  %s3 = inlined_call_operand.hbm [shape: f32[128,128], index: 3, kind: input, shape index: {}]
  %s4 = inlined_call_operand.vmem [shape: f32[1,128], index: 4, kind: input, shape index: {}]
  %s5 = inlined_call_operand.hbm [shape: f32[2,128], index: 5, kind: output, shape index: {}]
  %s6 = sld [smem:[#allocation0]]
  $region54: #{tpu_custom_call.1} parent=0
    _
  %s8 = ssub.s32 1, %s6
  %s9 = scalar_select 0, %s8, %s6
  $region1: #{tpu_custom_call.1} parent=0
    #allocation3 [shape = 'u8[4096]{0}', space=vmem, size = 0x1000, scoped, tag = 'input window, operand 0, single buffered']
    #allocation4 [shape = 's32[1]{0}', space=sflag, size = 0x4, scoped, tag = 'scoped memory for tpu_custom_call.1']
    #allocation5 [shape = 's32[1]{0}', space=sflag, size = 0x4, scoped, tag = 'scoped memory for tpu_custom_call.1']
    #allocation6 [shape = 'u8[4096]{0}', space=vmem, size = 0x1000, scoped, tag = 'input window, operand 1, single buffered']
    #allocation7 [shape = 's32[1]{0}', space=sflag, size = 0x4, scoped, tag = 'scoped memory for tpu_custom_call.1']
    #allocation8 [shape = 'u8[131072]{0}', space=vmem, size = 0x20000, scoped, tag = 'input window, operand 2, single buffered']
    #allocation9 [shape = 'u8[65536]{0}', space=vmem, size = 0x10000, scoped, tag = 'input window, operand 3, single buffered']
    #allocation10 [shape = 's32[1]{0}', space=sflag, size = 0x4, scoped, tag = 'scoped memory for tpu_custom_call.1']
    #allocation11 [shape = 'u8[1024]{0}', space=vmem, size = 0x400, scoped, tag = 'output window, operand 0, single buffered']
    %10 = vsyncpa [#allocation4], 0
    %11 = vsyncpa [#allocation7], 0
    %12 = vsyncpa [#allocation10], 0
    %13 = vsyncpa [#allocation5], 0
    // Predicated region
    $region2: #{tpu_custom_call.1} parent=1 // pred_check
      _
    $region3: #{tpu_custom_call.1} parent=1 // pred_check_branch
      %15 = sbr.rel (0) target = $region5
    $region4: #{tpu_custom_call.1} parent=1 // pred_region
      %17 = vsyncadd [#allocation4], 0
      %s19 = sshll.u32 %s0, 4
      %s20 = int_to_ptr.hbm [resolvable:$true] %s19
      %s21 = sshll.u32 [#allocation3], 4
      %s22 = int_to_ptr.vmem [resolvable:$true] %s21
      %24 = dma.hbm_to_vmem [thread:$0]  %s20, 128, %s22, [#allocation4]
    $region5: #{tpu_custom_call.1} parent=1 // pred_fallthru
      _
    // Predicated region
    $region6: #{tpu_custom_call.1} parent=1 // pred_check
      _
    $region7: #{tpu_custom_call.1} parent=1 // pred_check_branch
      %26 = sbr.rel (0) target = $region9
    $region8: #{tpu_custom_call.1} parent=1 // pred_region
      %28 = vsyncadd [#allocation7], 0
      %s30 = sshll.u32 %s1, 4
      %s31 = int_to_ptr.hbm [resolvable:$true] %s30
      %s32 = sshll.u32 [#allocation6], 4
      %s33 = int_to_ptr.vmem [resolvable:$true] %s32
      %35 = dma.hbm_to_vmem [thread:$0]  %s31, 128, %s33, [#allocation7]
    $region9: #{tpu_custom_call.1} parent=1 // pred_fallthru
      _
    // Predicated region
    $region10: #{tpu_custom_call.1} parent=1 // pred_check
      _
    $region11: #{tpu_custom_call.1} parent=1 // pred_check_branch
      %37 = sbr.rel (0) target = $region13
    $region12: #{tpu_custom_call.1} parent=1 // pred_region
      %39 = vsyncadd [#allocation7], 0
      %s40 = sshll.u32 %s2, 4
      %s41 = int_to_ptr.hbm [resolvable:$true] %s40
      %s42 = sshll.u32 [#allocation8], 4
      %s43 = int_to_ptr.vmem [resolvable:$true] %s42
      %48 = dma.hbm_to_vmem [thread:$0]  %s41, 4096, %s43, [#allocation7], 128, 128, 8
    $region13: #{tpu_custom_call.1} parent=1 // pred_fallthru
      _
    // Predicated region
    $region14: #{tpu_custom_call.1} parent=1 // pred_check
      _
    $region15: #{tpu_custom_call.1} parent=1 // pred_check_branch
      %50 = sbr.rel (0) target = $region17
    $region16: #{tpu_custom_call.1} parent=1 // pred_region
      %52 = vsyncadd [#allocation10], 0
      %s53 = sshll.u32 %s3, 4
      %s54 = int_to_ptr.hbm [resolvable:$true] %s53
      %s55 = sshll.u32 [#allocation9], 4
      %s56 = int_to_ptr.vmem [resolvable:$true] %s55
      %61 = dma.hbm_to_vmem [thread:$0]  %s54, 2048, %s56, [#allocation10], 128, 128, 8
    $region17: #{tpu_custom_call.1} parent=1 // pred_fallthru
      _
    // Predicated region
    $region18: #{tpu_custom_call.1} parent=1 // pred_check
      _
    $region19: #{tpu_custom_call.1} parent=1 // pred_check_branch
      %63 = sbr.rel (0) target = $region21
    $region20: #{tpu_custom_call.1} parent=1 // pred_region
      _
    $region21: #{tpu_custom_call.1} parent=1 // pred_fallthru
      _
    // Predicated region
    $region22: #{tpu_custom_call.1} parent=1 // pred_check
      _
    $region23: #{tpu_custom_call.1} parent=1 // pred_check_branch
      %65 = sbr.rel (0) target = $region25
    $region24: #{tpu_custom_call.1} parent=1 // pred_region
      %67 = dma.done [#allocation4], 128
    $region25: #{tpu_custom_call.1} parent=1 // pred_fallthru
      _
    // Predicated region
    $region26: #{tpu_custom_call.1} parent=1 // pred_check
      _
    $region27: #{tpu_custom_call.1} parent=1 // pred_check_branch
      %69 = sbr.rel (0) target = $region29
    $region28: #{tpu_custom_call.1} parent=1 // pred_region
      %71 = dma.done [#allocation7], 128
    $region29: #{tpu_custom_call.1} parent=1 // pred_fallthru
      _
    // Predicated region
    $region30: #{tpu_custom_call.1} parent=1 // pred_check
      _
    $region31: #{tpu_custom_call.1} parent=1 // pred_check_branch
      %73 = sbr.rel (0) target = $region33
    $region32: #{tpu_custom_call.1} parent=1 // pred_region
      %75 = dma.done [#allocation7], 4096
    $region33: #{tpu_custom_call.1} parent=1 // pred_fallthru
      _
    // Predicated region
    $region34: #{tpu_custom_call.1} parent=1 // pred_check
      _
    $region35: #{tpu_custom_call.1} parent=1 // pred_check_branch
      %77 = sbr.rel (0) target = $region37
    $region36: #{tpu_custom_call.1} parent=1 // pred_region
      %79 = dma.done [#allocation10], 2048
    $region37: #{tpu_custom_call.1} parent=1 // pred_fallthru
      _
    %p80 = scmp.eq.s32.totalorder 0, 0
    // Predicated region
    $region38: #{tpu_custom_call.1} parent=1 // pred_check
      %p81 = pneg %p80
    $region39: #{tpu_custom_call.1} parent=1 // pred_check_branch
      %83 = sbr.rel (%p81) target = $region41
    $region40: #{tpu_custom_call.1} parent=1 // pred_region
      %84 = vst [vmem:[#allocation2] sm:$0xff] 0.0
      %85 = vst [vmem:[#allocation2 + $0x8] sm:$0xff] 0.0
    $region41: #{tpu_custom_call.1} parent=1 // pred_fallthru
      _
    %v86 = vld [vmem:[#allocation3] sm:$0xff]
    %v87 = vld [vmem:[#allocation8] sm:$0xff]
    %v88 = vld [vmem:[#allocation8 + $0x8] sm:$0xff]
    %v89 = vld [vmem:[#allocation8 + $0x10] sm:$0xff]
    %v90 = vld [vmem:[#allocation8 + $0x18] sm:$0xff]
    %v91 = vld [vmem:[#allocation8 + $0x20] sm:$0xff]
    %v92 = vld [vmem:[#allocation8 + $0x28] sm:$0xff]
    %v93 = vld [vmem:[#allocation8 + $0x30] sm:$0xff]
    %v94 = vld [vmem:[#allocation8 + $0x38] sm:$0xff]
    %v95 = vld [vmem:[#allocation8 + $0x40] sm:$0xff]
    %v96 = vld [vmem:[#allocation8 + $0x48] sm:$0xff]
    %v97 = vld [vmem:[#allocation8 + $0x50] sm:$0xff]
    %v98 = vld [vmem:[#allocation8 + $0x58] sm:$0xff]
    %v99 = vld [vmem:[#allocation8 + $0x60] sm:$0xff]
    %v100 = vld [vmem:[#allocation8 + $0x68] sm:$0xff]
    %v101 = vld [vmem:[#allocation8 + $0x70] sm:$0xff]
    %v102 = vld [vmem:[#allocation8 + $0x78] sm:$0xff]
    %v103 = vld [vmem:[#allocation8 + $0x80] sm:$0xff]
    %v104 = vld [vmem:[#allocation8 + $0x88] sm:$0xff]
    %v105 = vld [vmem:[#allocation8 + $0x90] sm:$0xff]
    %v106 = vld [vmem:[#allocation8 + $0x98] sm:$0xff]
    %v107 = vld [vmem:[#allocation8 + $0xa0] sm:$0xff]
    %v108 = vld [vmem:[#allocation8 + $0xa8] sm:$0xff]
    %v109 = vld [vmem:[#allocation8 + $0xb0] sm:$0xff]
    %v110 = vld [vmem:[#allocation8 + $0xb8] sm:$0xff]
    %v111 = vld [vmem:[#allocation8 + $0xc0] sm:$0xff]
    %v112 = vld [vmem:[#allocation8 + $0xc8] sm:$0xff]
    %v113 = vld [vmem:[#allocation8 + $0xd0] sm:$0xff]
    %v114 = vld [vmem:[#allocation8 + $0xd8] sm:$0xff]
    %v115 = vld [vmem:[#allocation8 + $0xe0] sm:$0xff]
    %v116 = vld [vmem:[#allocation8 + $0xe8] sm:$0xff]
    %v117 = vld [vmem:[#allocation8 + $0xf0] sm:$0xff]
    %v118 = vld [vmem:[#allocation8 + $0xf8] sm:$0xff]
    %v119 = vld [vmem:[#allocation2] sm:$0xff]
    %v120 = vld [vmem:[#allocation2 + $0x8] sm:$0xff]
    %v122 = vunpack.c.l.b16 %v86
    %v123 = vunpack.c.h.b16 %v86
    %v124 = vpack.c.b16 %v122, %v122
    %v125 = vpack.c.b16 %v123, %v123
    %v160 = vunpack.c.l.b16 %v87
    %v161 = vunpack.c.h.b16 %v87
    %v162 = vunpack.c.l.b16 %v88
    %v163 = vunpack.c.h.b16 %v88
    %v164 = vunpack.c.l.b16 %v89
    %v165 = vunpack.c.h.b16 %v89
    %v166 = vunpack.c.l.b16 %v90
    %v167 = vunpack.c.h.b16 %v90
    %v168 = vunpack.c.l.b16 %v91
    %v169 = vunpack.c.h.b16 %v91
    %v170 = vunpack.c.l.b16 %v92
    %v171 = vunpack.c.h.b16 %v92
    %v172 = vunpack.c.l.b16 %v93
    %v173 = vunpack.c.h.b16 %v93
    %v174 = vunpack.c.l.b16 %v94
    %v175 = vunpack.c.h.b16 %v94
    %v176 = vunpack.c.l.b16 %v95
    %v177 = vunpack.c.h.b16 %v95
    %v178 = vunpack.c.l.b16 %v96
    %v179 = vunpack.c.h.b16 %v96
    %v180 = vunpack.c.l.b16 %v97
    %v181 = vunpack.c.h.b16 %v97
    %v182 = vunpack.c.l.b16 %v98
    %v183 = vunpack.c.h.b16 %v98
    %v184 = vunpack.c.l.b16 %v99
    %v185 = vunpack.c.h.b16 %v99
    %v186 = vunpack.c.l.b16 %v100
    %v187 = vunpack.c.h.b16 %v100
    %v188 = vunpack.c.l.b16 %v101
    %v189 = vunpack.c.h.b16 %v101
    %v190 = vunpack.c.l.b16 %v102
    %v191 = vunpack.c.h.b16 %v102
    %v192 = vunpack.c.l.b16 %v103
    %v193 = vunpack.c.h.b16 %v103
    %v194 = vunpack.c.l.b16 %v104
    %v195 = vunpack.c.h.b16 %v104
    %v196 = vunpack.c.l.b16 %v105
    %v197 = vunpack.c.h.b16 %v105
    %v198 = vunpack.c.l.b16 %v106
    %v199 = vunpack.c.h.b16 %v106
    %v200 = vunpack.c.l.b16 %v107
    %v201 = vunpack.c.h.b16 %v107
    %v202 = vunpack.c.l.b16 %v108
    %v203 = vunpack.c.h.b16 %v108
    %v204 = vunpack.c.l.b16 %v109
    %v205 = vunpack.c.h.b16 %v109
    %v206 = vunpack.c.l.b16 %v110
    %v207 = vunpack.c.h.b16 %v110
    %v208 = vunpack.c.l.b16 %v111
    %v209 = vunpack.c.h.b16 %v111
    %v210 = vunpack.c.l.b16 %v112
    %v211 = vunpack.c.h.b16 %v112
    %v212 = vunpack.c.l.b16 %v113
    %v213 = vunpack.c.h.b16 %v113
    %v214 = vunpack.c.l.b16 %v114
    %v215 = vunpack.c.h.b16 %v114
    %v216 = vunpack.c.l.b16 %v115
    %v217 = vunpack.c.h.b16 %v115
    %v218 = vunpack.c.l.b16 %v116
    %v219 = vunpack.c.h.b16 %v116
    %v220 = vunpack.c.l.b16 %v117
    %v221 = vunpack.c.h.b16 %v117
    %v222 = vunpack.c.l.b16 %v118
    %v223 = vunpack.c.h.b16 %v118
    %v224 = vpack.c.b16 %v162, %v160
    %v225 = vpack.c.b16 %v163, %v161
    %v226 = vpack.c.b16 %v166, %v164
    %v227 = vpack.c.b16 %v167, %v165
    %v228 = vpack.c.b16 %v170, %v168
    %v229 = vpack.c.b16 %v171, %v169
    %v230 = vpack.c.b16 %v174, %v172
    %v231 = vpack.c.b16 %v175, %v173
    %v232 = vpack.c.b16 %v178, %v176
    %v233 = vpack.c.b16 %v179, %v177
    %v234 = vpack.c.b16 %v182, %v180
    %v235 = vpack.c.b16 %v183, %v181
    %v236 = vpack.c.b16 %v186, %v184
    %v237 = vpack.c.b16 %v187, %v185
    %v238 = vpack.c.b16 %v190, %v188
    %v239 = vpack.c.b16 %v191, %v189
    %v240 = vpack.c.b16 %v194, %v192
    %v241 = vpack.c.b16 %v195, %v193
    %v242 = vpack.c.b16 %v198, %v196
    %v243 = vpack.c.b16 %v199, %v197
    %v244 = vpack.c.b16 %v202, %v200
    %v245 = vpack.c.b16 %v203, %v201
    %v246 = vpack.c.b16 %v206, %v204
    %v247 = vpack.c.b16 %v207, %v205
    %v248 = vpack.c.b16 %v210, %v208
    %v249 = vpack.c.b16 %v211, %v209
    %v250 = vpack.c.b16 %v214, %v212
    %v251 = vpack.c.b16 %v215, %v213
    %v252 = vpack.c.b16 %v218, %v216
    %v253 = vpack.c.b16 %v219, %v217
    %v254 = vpack.c.b16 %v222, %v220
    %v255 = vpack.c.b16 %v223, %v221
    %288 = vmatpush.bf16.msra.mxu0 %v238
    %289 = vmatpush.bf16.msra.mxu0 %v236
    %290 = vmatpush.bf16.msra.mxu0 %v234
    %291 = vmatpush.bf16.msra.mxu0 %v232
    %292 = vmatpush.bf16.msra.mxu0 %v230
    %293 = vmatpush.bf16.msra.mxu0 %v228
    %294 = vmatpush.bf16.msra.mxu0 %v226
    %295 = vmatpush.bf16.msra.mxu0 %v224
    %296 = vmatmul.bf16.gmra.mxu0 %v124
    %v297 = vpop.f32.mrf.mxu0
    %v298 = vadd.f32 0.0, %v297
    %v299 = vpop.f32.mrf.mxu0
    %300 = vdwg.mxu0
    %301 = vmatpush.bf16.msra.mxu0 %v254
    %302 = vmatpush.bf16.msra.mxu0 %v252
    %303 = vmatpush.bf16.msra.mxu0 %v250
    %304 = vmatpush.bf16.msra.mxu0 %v248
    %305 = vmatpush.bf16.msra.mxu0 %v246
    %306 = vmatpush.bf16.msra.mxu0 %v244
    %307 = vmatpush.bf16.msra.mxu0 %v242
    %308 = vmatpush.bf16.msra.mxu0 %v240
    %309 = vmatmul.bf16.gmra.mxu0 %v125
    %v310 = vpop.f32.mrf.mxu0
    %v311 = vadd.f32 %v298, %v310
    %v312 = vpop.f32.mrf.mxu0
    %313 = vdwg.mxu0
    %314 = vmatpush.bf16.msra.mxu0 %v239
    %315 = vmatpush.bf16.msra.mxu0 %v237
    %316 = vmatpush.bf16.msra.mxu0 %v235
    %317 = vmatpush.bf16.msra.mxu0 %v233
    %318 = vmatpush.bf16.msra.mxu0 %v231
    %319 = vmatpush.bf16.msra.mxu0 %v229
    %320 = vmatpush.bf16.msra.mxu0 %v227
    %321 = vmatpush.bf16.msra.mxu0 %v225
    %322 = vmatmul.bf16.gmra.mxu0 %v124
    %v323 = vpop.f32.mrf.mxu0
    %v324 = vadd.f32 0.0, %v323
    %v325 = vpop.f32.mrf.mxu0
    %326 = vdwg.mxu0
    %327 = vmatpush.bf16.msra.mxu0 %v255
    %328 = vmatpush.bf16.msra.mxu0 %v253
    %329 = vmatpush.bf16.msra.mxu0 %v251
    %330 = vmatpush.bf16.msra.mxu0 %v249
    %331 = vmatpush.bf16.msra.mxu0 %v247
    %332 = vmatpush.bf16.msra.mxu0 %v245
    %333 = vmatpush.bf16.msra.mxu0 %v243
    %334 = vmatpush.bf16.msra.mxu0 %v241
    %335 = vmatmul.bf16.gmra.mxu0 %v125
    %v336 = vpop.f32.mrf.mxu0
    %v337 = vadd.f32 %v324, %v336
    %v338 = vpop.f32.mrf.mxu0
    %339 = vdwg.mxu0
    %v340 = vadd.f32 %v119, %v311
    %v341 = vadd.f32 %v120, %v337
    %342 = vst [vmem:[#allocation2] sm:$0xff] %v340
    %343 = vst [vmem:[#allocation2 + $0x8] sm:$0xff] %v341
    // Predicated region
    $region42: #{tpu_custom_call.1} parent=1 // pred_check
      %p344 = pneg %p80
    $region43: #{tpu_custom_call.1} parent=1 // pred_check_branch
      %346 = sbr.rel (%p344) target = $region45
    $region44: #{tpu_custom_call.1} parent=1 // pred_region
      %v347 = vld [vmem:[#allocation2] sm:$0xff]
      %v348 = vld [vmem:[#allocation2 + $0x8] sm:$0xff]
      %v349 = vld [vmem:[#allocation6] sm:$0xff]
      %350 = vmatpush.xpose.msra.mxu0 0.0
      %351 = vmatpush.xpose.msra.mxu0 0.0
      %352 = vmatpush.xpose.msra.mxu0 0.0
      %353 = vmatpush.xpose.msra.mxu0 0.0
      %354 = vmatpush.xpose.msra.mxu0 0.0
      %355 = vmatpush.xpose.msra.mxu0 0.0
      %356 = vmatpush.xpose.msra.mxu0 0.0
      %357 = vmatpush.xpose.msra.mxu0 0.0
      %358 = vmatpush.xpose.msra.mxu0 0.0
      %359 = vmatpush.xpose.msra.mxu0 0.0
      %360 = vmatpush.xpose.msra.mxu0 0.0
      %361 = vmatpush.xpose.msra.mxu0 0.0
      %362 = vmatpush.xpose.msra.mxu0 0.0
      %363 = vmatpush.xpose.msra.mxu0 0.0
      %364 = vmatpush.xpose.msra.mxu0 0.0
      %365 = vmatpush.xpose.msra.mxu0 %v349
      %366 = vmatmul.f32.gmra.mxu0 %v347
      %v367 = vpop.f32.mrf.mxu0
      %v368 = vadd.f32 0.0, %v367
      %369 = vdwg.mxu0
      %v371 = vrot.slane %v368, 4
      %vm373 = vcmask 60416
      %v374 = vsel %vm373, %v368, -inf
      %v375 = vrot.slane %v374, 4
      %v376 = vmax.f32 %v374, %v375
      %v377 = vrot.slane %v376, 2
      %v378 = vmax.f32 %v376, %v377
      %v379 = vrot.slane %v378, 1
      %v380 = vmax.f32 %v378, %v379
      %v381 = vsel %vm373, %v371, -inf
      %v382 = vrot.slane %v381, 4
      %v383 = vmax.f32 %v381, %v382
      %v384 = vrot.slane %v383, 2
      %v385 = vmax.f32 %v383, %v384
      %v386 = vrot.slane %v385, 1
      %v387 = vmax.f32 %v385, %v386
      %v388 = vsub.f32 %v368, %v380
      %v389 = vsub.f32 %v371, %v387
      %v390 = vmul.f32 %v388, 1.442695
      %v391 = vpow.pop %v390
      %v392 = vmul.f32 %v389, 1.442695
      %v393 = vpow.pop %v392
      %v394 = vsel %vm373, %v391, 0.0
      %v395 = vrot.slane %v394, 4
      %v396 = vadd.f32 %v394, %v395
      %v397 = vrot.slane %v396, 2
      %v398 = vadd.f32 %v396, %v397
      %v399 = vrot.slane %v398, 1
      %v400 = vadd.f32 %v398, %v399
      %v401 = vsel %vm373, %v393, 0.0
      %v402 = vrot.slane %v401, 4
      %v403 = vadd.f32 %v401, %v402
      %v404 = vrot.slane %v403, 2
      %v405 = vadd.f32 %v403, %v404
      %v406 = vrot.slane %v405, 1
      %v407 = vadd.f32 %v405, %v406
      %v408 = vrcp.pop %v400
      %v409 = vmul.f32 %v400, %v408
      %v410 = vsub.f32 1.0, %v409
      %v411 = vmul.f32 %v408, %v410
      %v412 = vadd.f32 %v408, %v411
      %vm413 = vweird.f32 %v400
      %vm414 = vweird.f32 %v408
      %vm415 = vmor %vm413, %vm414
      %v416 = vsel %vm415, %v408, %v412
      %v417 = vand.u32 2147483647, %v400
      %vm418 = vcmp.eq.f32.partialorder %v417, 8.507059e+37
      %v419 = vand.u32 %v400, 2147483648
      %v420 = vor.u32 1.1754944e-38, %v419
      %v421 = vsel %vm418, %v420, %v416
      %v422 = vmul.f32 %v391, %v421
      %v423 = vrcp.pop %v407
      %v424 = vmul.f32 %v407, %v423
      %v425 = vsub.f32 1.0, %v424
      %v426 = vmul.f32 %v423, %v425
      %v427 = vadd.f32 %v423, %v426
      %vm428 = vweird.f32 %v407
      %vm429 = vweird.f32 %v423
      %vm430 = vmor %vm428, %vm429
      %v431 = vsel %vm430, %v423, %v427
      %v432 = vand.u32 2147483647, %v407
      %vm433 = vcmp.eq.f32.partialorder %v432, 8.507059e+37
      %v434 = vand.u32 %v407, 2147483648
      %v435 = vor.u32 1.1754944e-38, %v434
      %v436 = vsel %vm433, %v435, %v431
      %v437 = vmul.f32 %v393, %v436
      %v438 = vsel %vm373, %v422, 0.0
      %439 = vadd.xlane.f32.xlu0 %v438
      %v440 = vpop.xlane.xlu0 %439
      %v441 = vsel %vm373, %v437, 0.0
      %442 = vadd.xlane.f32.xlu0 %v441
      %v443 = vpop.xlane.xlu0 %442
      %v445 = vrot.slane %v348, 4
      %v447 = vmul.f32 %v440, %v348
      %v448 = vmul.f32 %v443, %v445
      %vm449 = vcmask 1043456
      %v450 = vsel %vm449, %v447, 0.0
      %v451 = vrot.slane %v450, 4
      %v452 = vadd.f32 %v450, %v451
      %v453 = vrot.slane %v452, 2
      %v454 = vadd.f32 %v452, %v453
      %v455 = vrot.slane %v454, 1
      %v456 = vadd.f32 %v454, %v455
      %v457 = vsel %vm449, %v448, 0.0
      %v458 = vrot.slane %v457, 4
      %v459 = vadd.f32 %v457, %v458
      %v460 = vrot.slane %v459, 2
      %v461 = vadd.f32 %v459, %v460
      %v462 = vrot.slane %v461, 1
      %v463 = vadd.f32 %v461, %v462
      %v464 = vmul.f32 %v456, 0.125
      %v465 = vmul.f32 %v463, 0.125
      %v466 = vld [vmem:[#allocation9] sm:$0xff]
      %v467 = vld [vmem:[#allocation9 + $0x8] sm:$0xff]
      %v468 = vld [vmem:[#allocation9 + $0x10] sm:$0xff]
      %v469 = vld [vmem:[#allocation9 + $0x18] sm:$0xff]
      %v470 = vld [vmem:[#allocation9 + $0x20] sm:$0xff]
      %v471 = vld [vmem:[#allocation9 + $0x28] sm:$0xff]
      %v472 = vld [vmem:[#allocation9 + $0x30] sm:$0xff]
      %v473 = vld [vmem:[#allocation9 + $0x38] sm:$0xff]
      %v474 = vld [vmem:[#allocation9 + $0x40] sm:$0xff]
      %v475 = vld [vmem:[#allocation9 + $0x48] sm:$0xff]
      %v476 = vld [vmem:[#allocation9 + $0x50] sm:$0xff]
      %v477 = vld [vmem:[#allocation9 + $0x58] sm:$0xff]
      %v478 = vld [vmem:[#allocation9 + $0x60] sm:$0xff]
      %v479 = vld [vmem:[#allocation9 + $0x68] sm:$0xff]
      %v480 = vld [vmem:[#allocation9 + $0x70] sm:$0xff]
      %v481 = vld [vmem:[#allocation9 + $0x78] sm:$0xff]
      %v482 = vld [vmem:[%s4] sm:$0x1]
      %v484 = vperm.slane %v482, 0
      %vm488 = vcmask 1041409
      %v489 = vsel %vm488, %v465, %v464
      %491 = vmatpush.msra.mxu0 %v481
      %492 = vmatpush.msra.mxu0 %v480
      %493 = vmatpush.msra.mxu0 %v479
      %494 = vmatpush.msra.mxu0 %v478
      %495 = vmatpush.msra.mxu0 %v477
      %496 = vmatpush.msra.mxu0 %v476
      %497 = vmatpush.msra.mxu0 %v475
      %498 = vmatpush.msra.mxu0 %v474
      %499 = vmatpush.msra.mxu0 %v473
      %500 = vmatpush.msra.mxu0 %v472
      %501 = vmatpush.msra.mxu0 %v471
      %502 = vmatpush.msra.mxu0 %v470
      %503 = vmatpush.msra.mxu0 %v469
      %504 = vmatpush.msra.mxu0 %v468
      %505 = vmatpush.msra.mxu0 %v467
      %506 = vmatpush.msra.mxu0 %v466
      %507 = vmatmul.f32.gmra.mxu0 %v489
      %v508 = vpop.f32.mrf.mxu0
      %v509 = vadd.f32 %v484, %v508
      %510 = vdwg.mxu0
      %v511 = vmax.f32 %v509, 0.0
      %v512 = vand.u32 2147483647, %v509
      %v513 = vsub.f32 0.0, %v512
      %v514 = vmul.f32 %v513, 1.442695
      %v515 = vpow.pop %v514
      %v516 = vadd.f32 %v515, 1.0
      %v517 = vlog2.pop %v516
      %v518 = vmul.f32 %v517, 0.6931472
      %v519 = vadd.f32 %v511, %v518
      %520 = vst [vmem:[#allocation11] sm:$0x3] %v519
    $region45: #{tpu_custom_call.1} parent=1 // pred_fallthru
      _
    // Predicated region
    $region46: #{tpu_custom_call.1} parent=1 // pred_check
      _
    $region47: #{tpu_custom_call.1} parent=1 // pred_check_branch
      %522 = sbr.rel (0) target = $region49
    $region48: #{tpu_custom_call.1} parent=1 // pred_region
      %524 = vsyncadd [#allocation5], 0
      %s526 = sshll.u32 [#allocation11], 4
      %s527 = int_to_ptr.vmem [resolvable:$true] %s526
      %s528 = sshll.u32 %s5, 4
      %s529 = int_to_ptr.hbm [resolvable:$true] %s528
      %531 = dma.vmem_to_hbm [thread:$0]  %s527, 32, %s529, [#allocation5]
    $region49: #{tpu_custom_call.1} parent=1 // pred_fallthru
      _
    // Predicated region
    $region50: #{tpu_custom_call.1} parent=1 // pred_check
      _
    $region51: #{tpu_custom_call.1} parent=1 // pred_check_branch
      %533 = sbr.rel (0) target = $region53
    $region52: #{tpu_custom_call.1} parent=1 // pred_region
      %535 = dma.done [#allocation5], 32
    $region53: #{tpu_custom_call.1} parent=1 // pred_fallthru
      _
    %536 = vsyncpa [#allocation4], 1
    %537 = vsyncpa [#allocation7], 1
    %538 = vsyncpa [#allocation10], 1
    %539 = vsyncpa [#allocation5], 1

</llo_original>
